<compile_context>
chip_gen: v5e
topology: v5e:2x2
jax: 0.10.0
libtpu: 0.0.40
codegen_flags: <defaults>
</compile_context>

<pallas_src>
import jax
import jax.numpy as jnp
from jax.experimental import pallas as pl
from jax.experimental.pallas import tpu as pltpu


def _gate_kernel(prob_ref, boxes_ref, cls_ref, boxes_out_ref, cls_out_ref):
    # prob_ref:  (Nb, HW)          objectness map for this batch chunk
    # boxes_ref: (Nb, Cb*HW)       channel-major flattened boxes
    # cls_ref:   (Nb, Cc*HW)       channel-major flattened class scores
    hw = prob_ref.shape[-1]
    cb = boxes_ref.shape[-1] // hw
    cc = cls_ref.shape[-1] // hw

    prob = prob_ref[...]  # (Nb, HW) f32

    # Replicate the objectness map along the lane axis so the select runs on
    # full-width, lane-dense vregs. Channel-major layout (index c*HW + hw)
    # matches the wrapper's contiguous reshape, so a simple lane-tile is the
    # correct broadcast.
    prob_b = jnp.tile(prob, (1, cb))  # (Nb, Cb*HW)
    prob_c = jnp.tile(prob, (1, cc))  # (Nb, Cc*HW)

    # Single compare + select per stream (no int->float convert, no extra mul).
    boxes_out_ref[...] = jnp.where(prob_b > 0.5, boxes_ref[...], 0.0)
    cls_out_ref[...] = jnp.where(prob_c > 0.5, cls_ref[...], 0.0)


def gate_layer(x_prob, x_boxes, x_cls, *, block_rows=None,
               vmem_budget_bytes=8 * 1024 * 1024):
    """x_prob: (N,1,H,W), x_boxes: (N,Cb,H,W), x_cls: (N,Cc,H,W) — float32 NCHW."""
    N, _, H, W = x_prob.shape
    Cb = x_boxes.shape[1]
    Cc = x_cls.shape[1]
    HW = H * W

    # Free, contiguous reshapes to a lane-dense 2D layout.
    prob_f = x_prob.reshape(N, HW)
    boxes_f = x_boxes.reshape(N, Cb * HW)
    cls_f = x_cls.reshape(N, Cc * HW)

    # Bytes per batch row across all 5 streams (prob in, boxes in/out,
    # cls in/out); the Pallas pipeline double-buffers each block.
    row_bytes = 4 * (HW + 2 * Cb * HW + 2 * Cc * HW)
    if block_rows is None:
        block_rows = max(1, vmem_budget_bytes // (2 * row_bytes))

    if N <= block_rows:
        # Single grid step covering the whole batch; block dims equal the full
        # array dims, so no (8,128) divisibility constraint applies.
        Nb = N
        Np = N
    else:
        # Multiple batch chunks: sublane-aligned block rows, pad N up to a
        # multiple of the block. Padded prob rows are 0 -> gate 0 -> outputs 0,
        # and they are sliced off below.
        Nb = max(8, (block_rows // 8) * 8)
        Np = pl.cdiv(N, Nb) * Nb
        if Np != N:
            pad = ((0, Np - N), (0, 0))
            prob_f = jnp.pad(prob_f, pad)
            boxes_f = jnp.pad(boxes_f, pad)
            cls_f = jnp.pad(cls_f, pad)

    grid = (Np // Nb,)

    boxes_g, cls_g = pl.pallas_call(
        _gate_kernel,
        out_shape=(
            jax.ShapeDtypeStruct((Np, Cb * HW), jnp.float32),
            jax.ShapeDtypeStruct((Np, Cc * HW), jnp.float32),
        ),
        grid_spec=pltpu.PrefetchScalarGridSpec(
            num_scalar_prefetch=0,
            grid=grid,
            in_specs=[
                pl.BlockSpec((Nb, HW), lambda n: (n, 0)),
                pl.BlockSpec((Nb, Cb * HW), lambda n: (n, 0)),
                pl.BlockSpec((Nb, Cc * HW), lambda n: (n, 0)),
            ],
            out_specs=[
                pl.BlockSpec((Nb, Cb * HW), lambda n: (n, 0)),
                pl.BlockSpec((Nb, Cc * HW), lambda n: (n, 0)),
            ],
        ),
        compiler_params=pltpu.CompilerParams(
            dimension_semantics=("parallel",),  # megacore sharding on v7x
        ),
    )(prob_f, boxes_f, cls_f)

    if Np != N:
        boxes_g = boxes_g[:N]
        cls_g = cls_g[:N]

    # x_prob is passed through unchanged, exactly like the PyTorch module.
    return (
        x_prob,
        boxes_g.reshape(N, Cb, H, W),
        cls_g.reshape(N, Cc, H, W),
    )


def _reference(x_prob, x_boxes, x_cls):
    gate = (x_prob > 0.5).astype(jnp.float32)
    return x_prob, x_boxes * gate, x_cls * gate


if __name__ == "__main__":
    key = jax.random.PRNGKey(0)
    k1, k2, k3 = jax.random.split(key, 3)

    N, H, W = 2, 16, 16
    NUM_CLASSES = 4

    # Deterministic synthetic inputs (module has no learnable parameters).
    x_prob = jax.random.uniform(k1, (N, 1, H, W), dtype=jnp.float32)   # in [0,1)
    x_boxes = jax.random.normal(k2, (N, 4, H, W), dtype=jnp.float32)
    x_cls = jax.random.normal(k3, (N, NUM_CLASSES, H, W), dtype=jnp.float32)

    out_prob, out_boxes, out_cls = jax.block_until_ready(
        gate_layer(x_prob, x_boxes, x_cls)
    )

    ref_prob, ref_boxes, ref_cls = _reference(x_prob, x_boxes, x_cls)
    assert jnp.array_equal(out_prob, ref_prob)
    assert jnp.allclose(out_boxes, ref_boxes)
    assert jnp.allclose(out_cls, ref_cls)

    # Also exercise the multi-chunk (padded-batch) path with a batch that does
    # not divide evenly into the block rows.
    N2 = 20
    k4, k5, k6 = jax.random.split(jax.random.PRNGKey(1), 3)
    xp2 = jax.random.uniform(k4, (N2, 1, H, W), dtype=jnp.float32)
    xb2 = jax.random.normal(k5, (N2, 4, H, W), dtype=jnp.float32)
    xc2 = jax.random.normal(k6, (N2, NUM_CLASSES, H, W), dtype=jnp.float32)
    _, ob2, oc2 = jax.block_until_ready(gate_layer(xp2, xb2, xc2, block_rows=8))
    _, rb2, rc2 = _reference(xp2, xb2, xc2)
    assert jnp.allclose(ob2, rb2)
    assert jnp.allclose(oc2, rc2)

    print("KERNEL_OK")
</pallas_src>

<mosaic_0001>
module attributes {stable_mosaic.version = 11 : i64} {
  func.func @_gate_kernel(%arg0: i32, %arg1: memref<2x256xf32, #tpu.memory_space<vmem>>, %arg2: memref<2x1024xf32, #tpu.memory_space<vmem>>, %arg3: memref<2x1024xf32, #tpu.memory_space<vmem>>, %arg4: memref<2x1024xf32, #tpu.memory_space<vmem>>, %arg5: memref<2x1024xf32, #tpu.memory_space<vmem>>) attributes {dimension_semantics = [#tpu.dimension_semantics<parallel>], iteration_bounds = array<i64: 1>, scalar_prefetch = 0 : i64, scratch_operands = 0 : i64, tpu.core_type = #tpu.core_type<tc>, window_params = [{transform_indices = @transform_0, window_bounds = array<i64: 2, 256>}, {transform_indices = @transform_1, window_bounds = array<i64: 2, 1024>}, {transform_indices = @transform_2, window_bounds = array<i64: 2, 1024>}, {transform_indices = @transform_3, window_bounds = array<i64: 2, 1024>}, {transform_indices = @transform_4, window_bounds = array<i64: 2, 1024>}]} {
    %c0 = arith.constant 0 : index
    %c0_0 = arith.constant 0 : index
    %0 = vector.load %arg1[%c0, %c0_0] : memref<2x256xf32, #tpu.memory_space<vmem>>, vector<2x256xf32>
    %1 = tpu.concatenate %0, %0, %0, %0 in 1 : vector<2x256xf32>, vector<2x256xf32>, vector<2x256xf32>, vector<2x256xf32> -> vector<2x1024xf32>
    %2 = tpu.concatenate %0, %0, %0, %0 in 1 : vector<2x256xf32>, vector<2x256xf32>, vector<2x256xf32>, vector<2x256xf32> -> vector<2x1024xf32>
    %cst = arith.constant 5.000000e-01 : f32
    %3 = vector.broadcast %cst : f32 to vector<2x1024xf32>
    %4 = arith.cmpf ogt, %1, %3 : vector<2x1024xf32>
    %c0_1 = arith.constant 0 : index
    %c0_2 = arith.constant 0 : index
    %5 = vector.load %arg2[%c0_1, %c0_2] : memref<2x1024xf32, #tpu.memory_space<vmem>>, vector<2x1024xf32>
    %cst_3 = arith.constant 0.000000e+00 : f32
    %6 = vector.broadcast %cst_3 : f32 to vector<2x1024xf32>
    %7 = arith.select %4, %5, %6 : vector<2x1024xi1>, vector<2x1024xf32>
    %c0_4 = arith.constant 0 : index
    %c0_5 = arith.constant 0 : index
    %8 = vector.load %arg4[%c0_4, %c0_5] : memref<2x1024xf32, #tpu.memory_space<vmem>>, vector<2x1024xf32>
    tpu.vector_store %arg4[%c0_4, %c0_5], %7 {strides = array<i32>} : memref<2x1024xf32, #tpu.memory_space<vmem>>, vector<2x1024xf32>,
    %cst_6 = arith.constant 5.000000e-01 : f32
    %9 = vector.broadcast %cst_6 : f32 to vector<2x1024xf32>
    %10 = arith.cmpf ogt, %2, %9 : vector<2x1024xf32>
    %c0_7 = arith.constant 0 : index
    %c0_8 = arith.constant 0 : index
    %11 = vector.load %arg3[%c0_7, %c0_8] : memref<2x1024xf32, #tpu.memory_space<vmem>>, vector<2x1024xf32>
    %cst_9 = arith.constant 0.000000e+00 : f32
    %12 = vector.broadcast %cst_9 : f32 to vector<2x1024xf32>
    %13 = arith.select %10, %11, %12 : vector<2x1024xi1>, vector<2x1024xf32>
    %c0_10 = arith.constant 0 : index
    %c0_11 = arith.constant 0 : index
    %14 = vector.load %arg5[%c0_10, %c0_11] : memref<2x1024xf32, #tpu.memory_space<vmem>>, vector<2x1024xf32>
    tpu.vector_store %arg5[%c0_10, %c0_11], %13 {strides = array<i32>} : memref<2x1024xf32, #tpu.memory_space<vmem>>, vector<2x1024xf32>,
    return
  }
  func.func @transform_0(%arg0: i32) -> (i32, i32) {
    %c0_i32 = arith.constant 0 : i32
    %c0_i32_0 = arith.constant 0 : i32
    return %arg0, %c0_i32 : i32, i32
  }
  func.func @transform_1(%arg0: i32) -> (i32, i32) {
    %c0_i32 = arith.constant 0 : i32
    %c0_i32_0 = arith.constant 0 : i32
    return %arg0, %c0_i32 : i32, i32
  }
  func.func @transform_2(%arg0: i32) -> (i32, i32) {
    %c0_i32 = arith.constant 0 : i32
    %c0_i32_0 = arith.constant 0 : i32
    return %arg0, %c0_i32 : i32, i32
  }
  func.func @transform_3(%arg0: i32) -> (i32, i32) {
    %c0_i32 = arith.constant 0 : i32
    %c0_i32_0 = arith.constant 0 : i32
    return %arg0, %c0_i32 : i32, i32
  }
  func.func @transform_4(%arg0: i32) -> (i32, i32) {
    %c0_i32 = arith.constant 0 : i32
    %c0_i32_0 = arith.constant 0 : i32
    return %arg0, %c0_i32 : i32, i32
  }
}

</mosaic_0001>

<llo_original>
// kernel: tpu_custom_call.1
$region0: #{tpu_custom_call.1}
  #allocation0 [shape = 'u32[]', space=smem, size = 0x4, offset = 0x4, fixed_abs, tag = 'smem constant byte address 0x4 - core index']
  #allocation1 [shape = 'u32[72,128]{1,0:T(1,128)}', space=vmem, size = 0x9000, scoped, tag = 'internal scratch']
  %s0 = inlined_call_operand.hbm [shape: f32[2,256], index: 0, kind: input, shape index: {}]
  %s1 = inlined_call_operand.hbm [shape: f32[2,1024], index: 1, kind: input, shape index: {}]
  %s2 = inlined_call_operand.hbm [shape: f32[2,1024], index: 2, kind: input, shape index: {}]
  %s3 = inlined_call_operand.hbm [shape: f32[2,1024], index: 3, kind: output, shape index: {0}]
  %s4 = inlined_call_operand.hbm [shape: f32[2,1024], index: 4, kind: output, shape index: {1}]
  %5 = xla_tuple %s3, %s4
  %s6 = sld [smem:[#allocation0]]
  $region42: #{tpu_custom_call.1} parent=0
    _
  %s8 = ssub.s32 1, %s6
  %s9 = scalar_select 0, %s8, %s6
  $region1: #{tpu_custom_call.1} parent=0
    #allocation2 [shape = 'u8[2048]{0}', space=vmem, size = 0x800, scoped, tag = 'input window, operand 0, single buffered']
    #allocation3 [shape = 's32[1]{0}', space=sflag, size = 0x4, scoped, tag = 'scoped memory for tpu_custom_call.1']
    #allocation4 [shape = 's32[1]{0}', space=sflag, size = 0x4, scoped, tag = 'scoped memory for tpu_custom_call.1']
    #allocation5 [shape = 'u8[8192]{0}', space=vmem, size = 0x2000, scoped, tag = 'input window, operand 1, single buffered']
    #allocation6 [shape = 's32[1]{0}', space=sflag, size = 0x4, scoped, tag = 'scoped memory for tpu_custom_call.1']
    #allocation7 [shape = 'u8[8192]{0}', space=vmem, size = 0x2000, scoped, tag = 'input window, operand 2, single buffered']
    #allocation8 [shape = 'u8[8192]{0}', space=vmem, size = 0x2000, scoped, tag = 'output window, operand 0, single buffered']
    #allocation9 [shape = 'u8[8192]{0}', space=vmem, size = 0x2000, scoped, tag = 'output window, operand 1, single buffered']
    #allocation10 [shape = 's32[1]{0}', space=sflag, size = 0x4, scoped, tag = 'scoped memory for tpu_custom_call.1']
    %10 = vsyncpa [#allocation3], 0
    %11 = vsyncpa [#allocation6], 0
    %12 = vsyncpa [#allocation4], 0
    %13 = vsyncpa [#allocation10], 0
    // Predicated region
    $region2: #{tpu_custom_call.1} parent=1 // pred_check
      _
    $region3: #{tpu_custom_call.1} parent=1 // pred_check_branch
      %15 = sbr.rel (0) target = $region5
    $region4: #{tpu_custom_call.1} parent=1 // pred_region
      %17 = vsyncadd [#allocation3], 0
      %s19 = sshll.u32 %s0, 4
      %s20 = int_to_ptr.hbm [resolvable:$true] %s19
      %s21 = sshll.u32 [#allocation2], 4
      %s22 = int_to_ptr.vmem [resolvable:$true] %s21
      %24 = dma.hbm_to_vmem [thread:$0]  %s20, 64, %s22, [#allocation3]
    $region5: #{tpu_custom_call.1} parent=1 // pred_fallthru
      _
    // Predicated region
    $region6: #{tpu_custom_call.1} parent=1 // pred_check
      _
    $region7: #{tpu_custom_call.1} parent=1 // pred_check_branch
      %26 = sbr.rel (0) target = $region9
    $region8: #{tpu_custom_call.1} parent=1 // pred_region
      %28 = vsyncadd [#allocation6], 0
      %s30 = sshll.u32 %s1, 4
      %s31 = int_to_ptr.hbm [resolvable:$true] %s30
      %s32 = sshll.u32 [#allocation5], 4
      %s33 = int_to_ptr.vmem [resolvable:$true] %s32
      %35 = dma.hbm_to_vmem [thread:$0]  %s31, 256, %s33, [#allocation6]
    $region9: #{tpu_custom_call.1} parent=1 // pred_fallthru
      _
    // Predicated region
    $region10: #{tpu_custom_call.1} parent=1 // pred_check
      _
    $region11: #{tpu_custom_call.1} parent=1 // pred_check_branch
      %37 = sbr.rel (0) target = $region13
    $region12: #{tpu_custom_call.1} parent=1 // pred_region
      %39 = vsyncadd [#allocation6], 0
      %s41 = sshll.u32 %s2, 4
      %s42 = int_to_ptr.hbm [resolvable:$true] %s41
      %s43 = sshll.u32 [#allocation7], 4
      %s44 = int_to_ptr.vmem [resolvable:$true] %s43
      %46 = dma.hbm_to_vmem [thread:$0]  %s42, 256, %s44, [#allocation6]
    $region13: #{tpu_custom_call.1} parent=1 // pred_fallthru
      _
    // Predicated region
    $region14: #{tpu_custom_call.1} parent=1 // pred_check
      _
    $region15: #{tpu_custom_call.1} parent=1 // pred_check_branch
      %48 = sbr.rel (0) target = $region17
    $region16: #{tpu_custom_call.1} parent=1 // pred_region
      %50 = dma.done [#allocation3], 64
    $region17: #{tpu_custom_call.1} parent=1 // pred_fallthru
      _
    // Predicated region
    $region18: #{tpu_custom_call.1} parent=1 // pred_check
      _
    $region19: #{tpu_custom_call.1} parent=1 // pred_check_branch
      %52 = sbr.rel (0) target = $region21
    $region20: #{tpu_custom_call.1} parent=1 // pred_region
      %54 = dma.done [#allocation6], 256
    $region21: #{tpu_custom_call.1} parent=1 // pred_fallthru
      _
    // Predicated region
    $region22: #{tpu_custom_call.1} parent=1 // pred_check
      _
    $region23: #{tpu_custom_call.1} parent=1 // pred_check_branch
      %56 = sbr.rel (0) target = $region25
    $region24: #{tpu_custom_call.1} parent=1 // pred_region
      %58 = dma.done [#allocation6], 256
    $region25: #{tpu_custom_call.1} parent=1 // pred_fallthru
      _
    %v59 = vld [vmem:[#allocation2] sm:$0xf]
    %61 = vst [vmem:[#allocation1] ss:$4 sm:$0xff] %v59
    %v62 = vld.sshfl [vmem:[#allocation1] sm:$0xff pattern:$0x73625140]
    %v63 = vld.sshfl [vmem:[#allocation1 + $0x8] sm:$0xff pattern:$0x73625140]
    %66 = vst [vmem:[#allocation1] ss:$4 sm:$0xff] %v59
    %v67 = vld.sshfl [vmem:[#allocation1] sm:$0xff pattern:$0x73625140]
    %v68 = vld.sshfl [vmem:[#allocation1 + $0x8] sm:$0xff pattern:$0x73625140]
    %71 = vst [vmem:[#allocation1] ss:$4 sm:$0xff] %v59
    %v72 = vld.sshfl [vmem:[#allocation1] sm:$0xff pattern:$0x73625140]
    %v73 = vld.sshfl [vmem:[#allocation1 + $0x8] sm:$0xff pattern:$0x73625140]
    %76 = vst [vmem:[#allocation1] ss:$4 sm:$0xff] %v59
    %v77 = vld.sshfl [vmem:[#allocation1] sm:$0xff pattern:$0x73625140]
    %v78 = vld.sshfl [vmem:[#allocation1 + $0x8] sm:$0xff pattern:$0x73625140]
    %vm81 = vcmp.gt.f32.partialorder %v62, 0.5
    %vm82 = vcmp.gt.f32.partialorder %v63, 0.5
    %vm83 = vcmp.gt.f32.partialorder %v67, 0.5
    %vm84 = vcmp.gt.f32.partialorder %v68, 0.5
    %vm85 = vcmp.gt.f32.partialorder %v72, 0.5
    %vm86 = vcmp.gt.f32.partialorder %v73, 0.5
    %vm87 = vcmp.gt.f32.partialorder %v77, 0.5
    %vm88 = vcmp.gt.f32.partialorder %v78, 0.5
    %v89 = vld [vmem:[#allocation5] sm:$0xff]
    %v90 = vld [vmem:[#allocation5 + $0x8] sm:$0xff]
    %93 = vst [vmem:[#allocation1] ss:$4 sm:$0xff] %v89
    %s94 = scalar_lea.vmem [#allocation1], 32
    %95 = vst [vmem:[%s94] ss:$4 sm:$0xff] %v90
    %v96 = vld.sshfl [vmem:[#allocation1] sm:$0xff pattern:$0x73625140]
    %v97 = vld.sshfl [vmem:[#allocation1 + $0x8] sm:$0xff pattern:$0x73625140]
    %v98 = vld.sshfl [vmem:[#allocation1 + $0x10] sm:$0xff pattern:$0x73625140]
    %v99 = vld.sshfl [vmem:[#allocation1 + $0x18] sm:$0xff pattern:$0x73625140]
    %v100 = vld.sshfl [vmem:[#allocation1 + $0x20] sm:$0xff pattern:$0x73625140]
    %v101 = vld.sshfl [vmem:[#allocation1 + $0x28] sm:$0xff pattern:$0x73625140]
    %v102 = vld.sshfl [vmem:[#allocation1 + $0x30] sm:$0xff pattern:$0x73625140]
    %v103 = vld.sshfl [vmem:[#allocation1 + $0x38] sm:$0xff pattern:$0x73625140]
    %v112 = vsel %vm81, %v96, 0.0
    %v113 = vsel %vm82, %v97, 0.0
    %v114 = vsel %vm83, %v98, 0.0
    %v115 = vsel %vm84, %v99, 0.0
    %v116 = vsel %vm85, %v100, 0.0
    %v117 = vsel %vm86, %v101, 0.0
    %v118 = vsel %vm87, %v102, 0.0
    %v119 = vsel %vm88, %v103, 0.0
    %v128 = vrot.slane %v113, 6
    %v129 = vrot.slane %v114, 4
    %v130 = vrot.slane %v115, 2
    %v131 = vrot.slane %v117, 6
    %v132 = vrot.slane %v118, 4
    %v133 = vrot.slane %v119, 2
    %vm134 = vcmask 1041408
    %v135 = vsel %vm134, %v112, %v128
    %vm136 = vcmask 1045508
    %v137 = vsel %vm136, %v129, %v130
    %vm138 = vcmask 1043456
    %v139 = vsel %vm138, %v135, %v137
    %v140 = vsel %vm134, %v116, %v131
    %v141 = vsel %vm136, %v132, %v133
    %v142 = vsel %vm138, %v140, %v141
    %145 = vst [vmem:[#allocation8] sm:$0xff] %v139
    %146 = vst [vmem:[#allocation8 + $0x8] sm:$0xff] %v142
    %v147 = vld [vmem:[#allocation7] sm:$0xff]
    %v148 = vld [vmem:[#allocation7 + $0x8] sm:$0xff]
    %151 = vst [vmem:[#allocation1] ss:$4 sm:$0xff] %v147
    %s152 = scalar_lea.vmem [#allocation1], 32
    %153 = vst [vmem:[%s152] ss:$4 sm:$0xff] %v148
    %v154 = vld.sshfl [vmem:[#allocation1] sm:$0xff pattern:$0x73625140]
    %v155 = vld.sshfl [vmem:[#allocation1 + $0x8] sm:$0xff pattern:$0x73625140]
    %v156 = vld.sshfl [vmem:[#allocation1 + $0x10] sm:$0xff pattern:$0x73625140]
    %v157 = vld.sshfl [vmem:[#allocation1 + $0x18] sm:$0xff pattern:$0x73625140]
    %v158 = vld.sshfl [vmem:[#allocation1 + $0x20] sm:$0xff pattern:$0x73625140]
    %v159 = vld.sshfl [vmem:[#allocation1 + $0x28] sm:$0xff pattern:$0x73625140]
    %v160 = vld.sshfl [vmem:[#allocation1 + $0x30] sm:$0xff pattern:$0x73625140]
    %v161 = vld.sshfl [vmem:[#allocation1 + $0x38] sm:$0xff pattern:$0x73625140]
    %v170 = vsel %vm81, %v154, 0.0
    %v171 = vsel %vm82, %v155, 0.0
    %v172 = vsel %vm83, %v156, 0.0
    %v173 = vsel %vm84, %v157, 0.0
    %v174 = vsel %vm85, %v158, 0.0
    %v175 = vsel %vm86, %v159, 0.0
    %v176 = vsel %vm87, %v160, 0.0
    %v177 = vsel %vm88, %v161, 0.0
    %v186 = vrot.slane %v171, 6
    %v187 = vrot.slane %v172, 4
    %v188 = vrot.slane %v173, 2
    %v189 = vrot.slane %v175, 6
    %v190 = vrot.slane %v176, 4
    %v191 = vrot.slane %v177, 2
    %v192 = vsel %vm134, %v170, %v186
    %v193 = vsel %vm136, %v187, %v188
    %v194 = vsel %vm138, %v192, %v193
    %v195 = vsel %vm134, %v174, %v189
    %v196 = vsel %vm136, %v190, %v191
    %v197 = vsel %vm138, %v195, %v196
    %200 = vst [vmem:[#allocation9] sm:$0xff] %v194
    %201 = vst [vmem:[#allocation9 + $0x8] sm:$0xff] %v197
    // Predicated region
    $region26: #{tpu_custom_call.1} parent=1 // pred_check
      _
    $region27: #{tpu_custom_call.1} parent=1 // pred_check_branch
      %203 = sbr.rel (0) target = $region29
    $region28: #{tpu_custom_call.1} parent=1 // pred_region
      %205 = vsyncadd [#allocation4], 0
      %s207 = sshll.u32 [#allocation8], 4
      %s208 = int_to_ptr.vmem [resolvable:$true] %s207
      %s209 = sshll.u32 %s3, 4
      %s210 = int_to_ptr.hbm [resolvable:$true] %s209
      %212 = dma.vmem_to_hbm [thread:$0]  %s208, 256, %s210, [#allocation4]
    $region29: #{tpu_custom_call.1} parent=1 // pred_fallthru
      _
    // Predicated region
    $region30: #{tpu_custom_call.1} parent=1 // pred_check
      _
    $region31: #{tpu_custom_call.1} parent=1 // pred_check_branch
      %214 = sbr.rel (0) target = $region33
    $region32: #{tpu_custom_call.1} parent=1 // pred_region
      %216 = vsyncadd [#allocation10], 0
      %s218 = sshll.u32 [#allocation9], 4
      %s219 = int_to_ptr.vmem [resolvable:$true] %s218
      %s220 = sshll.u32 %s4, 4
      %s221 = int_to_ptr.hbm [resolvable:$true] %s220
      %223 = dma.vmem_to_hbm [thread:$0]  %s219, 256, %s221, [#allocation10]
    $region33: #{tpu_custom_call.1} parent=1 // pred_fallthru
      _
    // Predicated region
    $region34: #{tpu_custom_call.1} parent=1 // pred_check
      _
    $region35: #{tpu_custom_call.1} parent=1 // pred_check_branch
      %225 = sbr.rel (0) target = $region37
    $region36: #{tpu_custom_call.1} parent=1 // pred_region
      %227 = dma.done [#allocation4], 256
    $region37: #{tpu_custom_call.1} parent=1 // pred_fallthru
      _
    // Predicated region
    $region38: #{tpu_custom_call.1} parent=1 // pred_check
      _
    $region39: #{tpu_custom_call.1} parent=1 // pred_check_branch
      %229 = sbr.rel (0) target = $region41
    $region40: #{tpu_custom_call.1} parent=1 // pred_region
      %231 = dma.done [#allocation10], 256
    $region41: #{tpu_custom_call.1} parent=1 // pred_fallthru
      _
    %232 = vsyncpa [#allocation3], 1
    %233 = vsyncpa [#allocation6], 1
    %234 = vsyncpa [#allocation4], 1
    %235 = vsyncpa [#allocation10], 1

</llo_original>
